<compile_context>
chip_gen: v6e
topology: v6e:2x2x1
jax: 0.10.0
libtpu: 0.0.40
codegen_flags: <defaults>
</compile_context>

<pallas_src>
import functools

import jax
import jax.numpy as jnp
from jax import lax
from jax.experimental import pallas as pl
from jax.experimental.pallas import tpu as pltpu


def lstm_fc_kernel(xw_ref, whh_ref, wfc_ref, bfc_ref, out_ref):
    """LSTM recurrence over precomputed input projections, then final Linear.

    xw_ref  : (S, Bp, 4H) time-major x_t @ W_ih^T + (b_ih + b_hh)
    whh_ref : (H, 4H)     hidden->gates weights (transposed, gate order i,f,g,o)
    wfc_ref : (H, Cp)     fc weight (transposed, lane-padded)
    bfc_ref : (1, Cp)     fc bias (lane-padded)
    out_ref : (Bp, Cp)    logits (padded; wrapper slices to (B, C))
    """
    S = xw_ref.shape[0]
    Bp = xw_ref.shape[1]
    H = whh_ref.shape[0]

    # Hoist weight loads out of the recurrence (they fit in the vreg file).
    whh = whh_ref[...]                                   # (H, 4H)
    wfc = wfc_ref[...]                                   # (H, Cp)
    bfc = bfc_ref[...]                                   # (1, Cp)

    h0 = jnp.zeros((Bp, H), jnp.float32)
    c0 = jnp.zeros((Bp, H), jnp.float32)

    def step(t, carry):
        h, c = carry
        gates = xw_ref[t] + jnp.dot(h, whh,
                                    preferred_element_type=jnp.float32)  # (Bp,4H)
        # Two full-width EUP ops instead of four per-gate calls.
        sig = jax.nn.sigmoid(gates)
        th = jnp.tanh(gates)
        i = sig[:, 0 * H:1 * H]
        f = sig[:, 1 * H:2 * H]
        g = th[:, 2 * H:3 * H]
        o = sig[:, 3 * H:4 * H]
        c_new = f * c + i * g
        h_new = o * jnp.tanh(c_new)
        return (h_new, c_new)

    # S is static and small -> fully unroll for cross-step scheduling.
    h, _ = lax.fori_loop(0, S, step, (h0, c0), unroll=True)

    out_ref[...] = (jnp.dot(h, wfc, preferred_element_type=jnp.float32)
                    + bfc).astype(out_ref.dtype)


def _round_up(x, m):
    return ((x + m - 1) // m) * m


@functools.partial(jax.jit, static_argnames=())
def text_rnn_forward(x_tokens, emb_table, w_ih, w_hh, b_ih, b_hh, w_fc, b_fc):
    """Full TextRNN forward.  Embedding gather + input projection are XLA glue;
    the serial LSTM recurrence + final FC run in the Pallas kernel."""
    B, S = x_tokens.shape
    H = w_hh.shape[1]
    C = w_fc.shape[0]

    Bp = max(8, _round_up(B, 8))          # f32 sublane multiple
    Cp = max(128, _round_up(C, 128))      # lane-dense output store

    # Embedding lookup (padding_idx=0 row is already zero in emb_table).
    embedded = emb_table[x_tokens.astype(jnp.int32)]       # (B, S, E)

    # Hoisted input projection: one big parallel matmul instead of S tiny ones
    # on the recurrence critical path.  Bias folded in here.
    bias = (b_ih + b_hh).reshape(1, 1, 4 * H)
    xw = jnp.einsum('bse,eg->bsg', embedded, w_ih.T,
                    preferred_element_type=jnp.float32) + bias   # (B, S, 4H)
    xw = jnp.transpose(xw, (1, 0, 2))                            # (S, B, 4H)
    if Bp != B:
        xw = jnp.pad(xw, ((0, 0), (0, Bp - B), (0, 0)))          # (S, Bp, 4H)

    whh_t = w_hh.T                                               # (H, 4H)
    wfc_t = jnp.zeros((H, Cp), jnp.float32).at[:, :C].set(w_fc.T)
    bfc_p = jnp.zeros((1, Cp), jnp.float32).at[:, :C].set(b_fc.reshape(1, C))

    # TODO(synk): for large S/B/E, tile xw over S with a BlockSpec grid
    # (reduction axis "arbitrary") instead of a whole-array VMEM slab, and add
    # a parallel batch grid axis for v7x's second TensorCore.
    vmem = pl.BlockSpec(memory_space=pltpu.MemorySpace.VMEM)
    out = pl.pallas_call(
        lstm_fc_kernel,
        out_shape=jax.ShapeDtypeStruct((Bp, Cp), jnp.float32),
        in_specs=[vmem] * 4,
        out_specs=vmem,
    )(xw, whh_t, wfc_t, bfc_p)
    return out[:B, :C]


def reference_forward(x_tokens, emb_table, w_ih, w_hh, b_ih, b_hh, w_fc, b_fc):
    """Pure-JAX reference matching PyTorch LSTM semantics."""
    B, S = x_tokens.shape
    H = w_hh.shape[1]
    embedded = emb_table[x_tokens.astype(jnp.int32)]       # (B, S, E)

    def step(carry, x_t):
        h, c = carry
        gates = x_t @ w_ih.T + h @ w_hh.T + b_ih + b_hh
        i = jax.nn.sigmoid(gates[:, 0 * H:1 * H])
        f = jax.nn.sigmoid(gates[:, 1 * H:2 * H])
        g = jnp.tanh(gates[:, 2 * H:3 * H])
        o = jax.nn.sigmoid(gates[:, 3 * H:4 * H])
        c = f * c + i * g
        h = o * jnp.tanh(c)
        return (h, c), None

    h0 = jnp.zeros((B, H), jnp.float32)
    c0 = jnp.zeros((B, H), jnp.float32)
    (h, _), _ = lax.scan(step, (h0, c0), jnp.transpose(embedded, (1, 0, 2)))
    return h @ w_fc.T + b_fc


if __name__ == "__main__":
    vocab_size, embed_dim, hidden_dim, num_classes = 50, 16, 32, 5
    batch, seq_len = 2, 8

    key = jax.random.PRNGKey(0)
    k_emb, k_tok, k_wih, k_whh, k_bih, k_bhh, k_wfc, k_bfc = jax.random.split(key, 8)

    # nn.Embedding init ~ N(0,1); padding_idx=0 row zeroed.
    emb_table = jax.random.normal(k_emb, (vocab_size, embed_dim), jnp.float32)
    emb_table = emb_table.at[0].set(0.0)

    # nn.LSTM init ~ U(-1/sqrt(H), 1/sqrt(H)); gate order [i, f, g, o].
    s = 1.0 / jnp.sqrt(jnp.float32(hidden_dim))
    w_ih = jax.random.uniform(k_wih, (4 * hidden_dim, embed_dim), jnp.float32, -s, s)
    w_hh = jax.random.uniform(k_whh, (4 * hidden_dim, hidden_dim), jnp.float32, -s, s)
    b_ih = jax.random.uniform(k_bih, (4 * hidden_dim,), jnp.float32, -s, s)
    b_hh = jax.random.uniform(k_bhh, (4 * hidden_dim,), jnp.float32, -s, s)

    # nn.Linear init ~ U(-1/sqrt(H), 1/sqrt(H)).
    w_fc = jax.random.uniform(k_wfc, (num_classes, hidden_dim), jnp.float32, -s, s)
    b_fc = jax.random.uniform(k_bfc, (num_classes,), jnp.float32, -s, s)

    # Token ids in [0, vocab_size), int32 (module casts to long; ids >= 0).
    x_tokens = jax.random.randint(k_tok, (batch, seq_len), 0, vocab_size, jnp.int32)

    out = text_rnn_forward(x_tokens, emb_table, w_ih, w_hh, b_ih, b_hh, w_fc, b_fc)
    out = jax.block_until_ready(out)

    ref = reference_forward(x_tokens, emb_table, w_ih, w_hh, b_ih, b_hh, w_fc, b_fc)
    assert out.shape == (batch, num_classes)
    assert jnp.allclose(out, ref, atol=1e-5, rtol=1e-5), (out, ref)

    print("KERNEL_OK")
</pallas_src>

<mosaic_0001>
module attributes {stable_mosaic.version = 11 : i64} {
  func.func @lstm_fc_kernel(%arg0: memref<8x8x128xf32, #tpu.memory_space<vmem>>, %arg1: memref<32x128xf32, #tpu.memory_space<vmem>>, %arg2: memref<32x128xf32, #tpu.memory_space<vmem>>, %arg3: memref<1x128xf32, #tpu.memory_space<vmem>>, %arg4: memref<8x128xf32, #tpu.memory_space<vmem>>) attributes {dimension_semantics = [], scalar_prefetch = 0 : i64, scratch_operands = 0 : i64, tpu.core_type = #tpu.core_type<tc>} {
    %c0 = arith.constant 0 : index
    %c0_0 = arith.constant 0 : index
    %0 = vector.load %arg1[%c0, %c0_0] : memref<32x128xf32, #tpu.memory_space<vmem>>, vector<32x128xf32>
    %c0_1 = arith.constant 0 : index
    %c0_2 = arith.constant 0 : index
    %1 = vector.load %arg2[%c0_1, %c0_2] : memref<32x128xf32, #tpu.memory_space<vmem>>, vector<32x128xf32>
    %c0_3 = arith.constant 0 : index
    %c0_4 = arith.constant 0 : index
    %2 = vector.load %arg3[%c0_3, %c0_4] : memref<1x128xf32, #tpu.memory_space<vmem>>, vector<1x128xf32>
    %cst = arith.constant 0.000000e+00 : f32
    %3 = vector.broadcast %cst : f32 to vector<8x32xf32>
    %cst_5 = arith.constant 0.000000e+00 : f32
    %4 = vector.broadcast %cst_5 : f32 to vector<8x32xf32>
    %c0_i32 = arith.constant 0 : i32
    %5 = arith.index_cast %c0_i32 : i32 to index
    %c0_6 = arith.constant 0 : index
    %c0_7 = arith.constant 0 : index
    %6 = vector.load %arg0[%5, %c0_6, %c0_7] : memref<8x8x128xf32, #tpu.memory_space<vmem>>, vector<1x8x128xf32>
    %7 = vector.shape_cast %6 : vector<1x8x128xf32> to vector<8x128xf32>
    %cst_8 = arith.constant dense<0.000000e+00> : vector<8x128xf32>
    %8 = tpu.matmul %3, %0, %cst_8 {dimension_numbers = #tpu.dot_dimension_numbers<[1], [0], [0], [1], [0, 0, 1, 1], [], []>} : vector<8x32xf32>, vector<32x128xf32>, vector<8x128xf32> -> vector<8x128xf32>
    %9 = arith.addf %7, %8 : vector<8x128xf32>
    %10 = arith.negf %9 : vector<8x128xf32>
    %11 = math.exp %10 : vector<8x128xf32>
    %cst_9 = arith.constant 1.000000e+00 : f32
    %12 = vector.broadcast %cst_9 : f32 to vector<8x128xf32>
    %13 = arith.addf %12, %11 : vector<8x128xf32>
    %14 = arith.divf %12, %13 : vector<8x128xf32>
    %15 = math.tanh %9 : vector<8x128xf32>
    %16 = vector.extract_strided_slice %14 {offsets = [0, 0], sizes = [8, 32], strides = [1, 1]} : vector<8x128xf32> to vector<8x32xf32>
    %17 = vector.extract_strided_slice %14 {offsets = [0, 32], sizes = [8, 32], strides = [1, 1]} : vector<8x128xf32> to vector<8x32xf32>
    %18 = vector.extract_strided_slice %15 {offsets = [0, 64], sizes = [8, 32], strides = [1, 1]} : vector<8x128xf32> to vector<8x32xf32>
    %19 = vector.extract_strided_slice %14 {offsets = [0, 96], sizes = [8, 32], strides = [1, 1]} : vector<8x128xf32> to vector<8x32xf32>
    %20 = arith.mulf %17, %4 : vector<8x32xf32>
    %21 = arith.mulf %16, %18 : vector<8x32xf32>
    %22 = arith.addf %20, %21 : vector<8x32xf32>
    %23 = math.tanh %22 : vector<8x32xf32>
    %24 = arith.mulf %19, %23 : vector<8x32xf32>
    %c1_i32 = arith.constant 1 : i32
    %25 = arith.index_cast %c1_i32 : i32 to index
    %c0_10 = arith.constant 0 : index
    %c0_11 = arith.constant 0 : index
    %26 = vector.load %arg0[%25, %c0_10, %c0_11] : memref<8x8x128xf32, #tpu.memory_space<vmem>>, vector<1x8x128xf32>
    %27 = vector.shape_cast %26 : vector<1x8x128xf32> to vector<8x128xf32>
    %cst_12 = arith.constant dense<0.000000e+00> : vector<8x128xf32>
    %28 = tpu.matmul %24, %0, %cst_12 {dimension_numbers = #tpu.dot_dimension_numbers<[1], [0], [0], [1], [0, 0, 1, 1], [], []>} : vector<8x32xf32>, vector<32x128xf32>, vector<8x128xf32> -> vector<8x128xf32>
    %29 = arith.addf %27, %28 : vector<8x128xf32>
    %30 = arith.negf %29 : vector<8x128xf32>
    %31 = math.exp %30 : vector<8x128xf32>
    %cst_13 = arith.constant 1.000000e+00 : f32
    %32 = vector.broadcast %cst_13 : f32 to vector<8x128xf32>
    %33 = arith.addf %32, %31 : vector<8x128xf32>
    %34 = arith.divf %32, %33 : vector<8x128xf32>
    %35 = math.tanh %29 : vector<8x128xf32>
    %36 = vector.extract_strided_slice %34 {offsets = [0, 0], sizes = [8, 32], strides = [1, 1]} : vector<8x128xf32> to vector<8x32xf32>
    %37 = vector.extract_strided_slice %34 {offsets = [0, 32], sizes = [8, 32], strides = [1, 1]} : vector<8x128xf32> to vector<8x32xf32>
    %38 = vector.extract_strided_slice %35 {offsets = [0, 64], sizes = [8, 32], strides = [1, 1]} : vector<8x128xf32> to vector<8x32xf32>
    %39 = vector.extract_strided_slice %34 {offsets = [0, 96], sizes = [8, 32], strides = [1, 1]} : vector<8x128xf32> to vector<8x32xf32>
    %40 = arith.mulf %37, %22 : vector<8x32xf32>
    %41 = arith.mulf %36, %38 : vector<8x32xf32>
    %42 = arith.addf %40, %41 : vector<8x32xf32>
    %43 = math.tanh %42 : vector<8x32xf32>
    %44 = arith.mulf %39, %43 : vector<8x32xf32>
    %c2_i32 = arith.constant 2 : i32
    %45 = arith.index_cast %c2_i32 : i32 to index
    %c0_14 = arith.constant 0 : index
    %c0_15 = arith.constant 0 : index
    %46 = vector.load %arg0[%45, %c0_14, %c0_15] : memref<8x8x128xf32, #tpu.memory_space<vmem>>, vector<1x8x128xf32>
    %47 = vector.shape_cast %46 : vector<1x8x128xf32> to vector<8x128xf32>
    %cst_16 = arith.constant dense<0.000000e+00> : vector<8x128xf32>
    %48 = tpu.matmul %44, %0, %cst_16 {dimension_numbers = #tpu.dot_dimension_numbers<[1], [0], [0], [1], [0, 0, 1, 1], [], []>} : vector<8x32xf32>, vector<32x128xf32>, vector<8x128xf32> -> vector<8x128xf32>
    %49 = arith.addf %47, %48 : vector<8x128xf32>
    %50 = arith.negf %49 : vector<8x128xf32>
    %51 = math.exp %50 : vector<8x128xf32>
    %cst_17 = arith.constant 1.000000e+00 : f32
    %52 = vector.broadcast %cst_17 : f32 to vector<8x128xf32>
    %53 = arith.addf %52, %51 : vector<8x128xf32>
    %54 = arith.divf %52, %53 : vector<8x128xf32>
    %55 = math.tanh %49 : vector<8x128xf32>
    %56 = vector.extract_strided_slice %54 {offsets = [0, 0], sizes = [8, 32], strides = [1, 1]} : vector<8x128xf32> to vector<8x32xf32>
    %57 = vector.extract_strided_slice %54 {offsets = [0, 32], sizes = [8, 32], strides = [1, 1]} : vector<8x128xf32> to vector<8x32xf32>
    %58 = vector.extract_strided_slice %55 {offsets = [0, 64], sizes = [8, 32], strides = [1, 1]} : vector<8x128xf32> to vector<8x32xf32>
    %59 = vector.extract_strided_slice %54 {offsets = [0, 96], sizes = [8, 32], strides = [1, 1]} : vector<8x128xf32> to vector<8x32xf32>
    %60 = arith.mulf %57, %42 : vector<8x32xf32>
    %61 = arith.mulf %56, %58 : vector<8x32xf32>
    %62 = arith.addf %60, %61 : vector<8x32xf32>
    %63 = math.tanh %62 : vector<8x32xf32>
    %64 = arith.mulf %59, %63 : vector<8x32xf32>
    %c3_i32 = arith.constant 3 : i32
    %65 = arith.index_cast %c3_i32 : i32 to index
    %c0_18 = arith.constant 0 : index
    %c0_19 = arith.constant 0 : index
    %66 = vector.load %arg0[%65, %c0_18, %c0_19] : memref<8x8x128xf32, #tpu.memory_space<vmem>>, vector<1x8x128xf32>
    %67 = vector.shape_cast %66 : vector<1x8x128xf32> to vector<8x128xf32>
    %cst_20 = arith.constant dense<0.000000e+00> : vector<8x128xf32>
    %68 = tpu.matmul %64, %0, %cst_20 {dimension_numbers = #tpu.dot_dimension_numbers<[1], [0], [0], [1], [0, 0, 1, 1], [], []>} : vector<8x32xf32>, vector<32x128xf32>, vector<8x128xf32> -> vector<8x128xf32>
    %69 = arith.addf %67, %68 : vector<8x128xf32>
    %70 = arith.negf %69 : vector<8x128xf32>
    %71 = math.exp %70 : vector<8x128xf32>
    %cst_21 = arith.constant 1.000000e+00 : f32
    %72 = vector.broadcast %cst_21 : f32 to vector<8x128xf32>
    %73 = arith.addf %72, %71 : vector<8x128xf32>
    %74 = arith.divf %72, %73 : vector<8x128xf32>
    %75 = math.tanh %69 : vector<8x128xf32>
    %76 = vector.extract_strided_slice %74 {offsets = [0, 0], sizes = [8, 32], strides = [1, 1]} : vector<8x128xf32> to vector<8x32xf32>
    %77 = vector.extract_strided_slice %74 {offsets = [0, 32], sizes = [8, 32], strides = [1, 1]} : vector<8x128xf32> to vector<8x32xf32>
    %78 = vector.extract_strided_slice %75 {offsets = [0, 64], sizes = [8, 32], strides = [1, 1]} : vector<8x128xf32> to vector<8x32xf32>
    %79 = vector.extract_strided_slice %74 {offsets = [0, 96], sizes = [8, 32], strides = [1, 1]} : vector<8x128xf32> to vector<8x32xf32>
    %80 = arith.mulf %77, %62 : vector<8x32xf32>
    %81 = arith.mulf %76, %78 : vector<8x32xf32>
    %82 = arith.addf %80, %81 : vector<8x32xf32>
    %83 = math.tanh %82 : vector<8x32xf32>
    %84 = arith.mulf %79, %83 : vector<8x32xf32>
    %c4_i32 = arith.constant 4 : i32
    %85 = arith.index_cast %c4_i32 : i32 to index
    %c0_22 = arith.constant 0 : index
    %c0_23 = arith.constant 0 : index
    %86 = vector.load %arg0[%85, %c0_22, %c0_23] : memref<8x8x128xf32, #tpu.memory_space<vmem>>, vector<1x8x128xf32>
    %87 = vector.shape_cast %86 : vector<1x8x128xf32> to vector<8x128xf32>
    %cst_24 = arith.constant dense<0.000000e+00> : vector<8x128xf32>
    %88 = tpu.matmul %84, %0, %cst_24 {dimension_numbers = #tpu.dot_dimension_numbers<[1], [0], [0], [1], [0, 0, 1, 1], [], []>} : vector<8x32xf32>, vector<32x128xf32>, vector<8x128xf32> -> vector<8x128xf32>
    %89 = arith.addf %87, %88 : vector<8x128xf32>
    %90 = arith.negf %89 : vector<8x128xf32>
    %91 = math.exp %90 : vector<8x128xf32>
    %cst_25 = arith.constant 1.000000e+00 : f32
    %92 = vector.broadcast %cst_25 : f32 to vector<8x128xf32>
    %93 = arith.addf %92, %91 : vector<8x128xf32>
    %94 = arith.divf %92, %93 : vector<8x128xf32>
    %95 = math.tanh %89 : vector<8x128xf32>
    %96 = vector.extract_strided_slice %94 {offsets = [0, 0], sizes = [8, 32], strides = [1, 1]} : vector<8x128xf32> to vector<8x32xf32>
    %97 = vector.extract_strided_slice %94 {offsets = [0, 32], sizes = [8, 32], strides = [1, 1]} : vector<8x128xf32> to vector<8x32xf32>
    %98 = vector.extract_strided_slice %95 {offsets = [0, 64], sizes = [8, 32], strides = [1, 1]} : vector<8x128xf32> to vector<8x32xf32>
    %99 = vector.extract_strided_slice %94 {offsets = [0, 96], sizes = [8, 32], strides = [1, 1]} : vector<8x128xf32> to vector<8x32xf32>
    %100 = arith.mulf %97, %82 : vector<8x32xf32>
    %101 = arith.mulf %96, %98 : vector<8x32xf32>
    %102 = arith.addf %100, %101 : vector<8x32xf32>
    %103 = math.tanh %102 : vector<8x32xf32>
    %104 = arith.mulf %99, %103 : vector<8x32xf32>
    %c5_i32 = arith.constant 5 : i32
    %105 = arith.index_cast %c5_i32 : i32 to index
    %c0_26 = arith.constant 0 : index
    %c0_27 = arith.constant 0 : index
    %106 = vector.load %arg0[%105, %c0_26, %c0_27] : memref<8x8x128xf32, #tpu.memory_space<vmem>>, vector<1x8x128xf32>
    %107 = vector.shape_cast %106 : vector<1x8x128xf32> to vector<8x128xf32>
    %cst_28 = arith.constant dense<0.000000e+00> : vector<8x128xf32>
    %108 = tpu.matmul %104, %0, %cst_28 {dimension_numbers = #tpu.dot_dimension_numbers<[1], [0], [0], [1], [0, 0, 1, 1], [], []>} : vector<8x32xf32>, vector<32x128xf32>, vector<8x128xf32> -> vector<8x128xf32>
    %109 = arith.addf %107, %108 : vector<8x128xf32>
    %110 = arith.negf %109 : vector<8x128xf32>
    %111 = math.exp %110 : vector<8x128xf32>
    %cst_29 = arith.constant 1.000000e+00 : f32
    %112 = vector.broadcast %cst_29 : f32 to vector<8x128xf32>
    %113 = arith.addf %112, %111 : vector<8x128xf32>
    %114 = arith.divf %112, %113 : vector<8x128xf32>
    %115 = math.tanh %109 : vector<8x128xf32>
    %116 = vector.extract_strided_slice %114 {offsets = [0, 0], sizes = [8, 32], strides = [1, 1]} : vector<8x128xf32> to vector<8x32xf32>
    %117 = vector.extract_strided_slice %114 {offsets = [0, 32], sizes = [8, 32], strides = [1, 1]} : vector<8x128xf32> to vector<8x32xf32>
    %118 = vector.extract_strided_slice %115 {offsets = [0, 64], sizes = [8, 32], strides = [1, 1]} : vector<8x128xf32> to vector<8x32xf32>
    %119 = vector.extract_strided_slice %114 {offsets = [0, 96], sizes = [8, 32], strides = [1, 1]} : vector<8x128xf32> to vector<8x32xf32>
    %120 = arith.mulf %117, %102 : vector<8x32xf32>
    %121 = arith.mulf %116, %118 : vector<8x32xf32>
    %122 = arith.addf %120, %121 : vector<8x32xf32>
    %123 = math.tanh %122 : vector<8x32xf32>
    %124 = arith.mulf %119, %123 : vector<8x32xf32>
    %c6_i32 = arith.constant 6 : i32
    %125 = arith.index_cast %c6_i32 : i32 to index
    %c0_30 = arith.constant 0 : index
    %c0_31 = arith.constant 0 : index
    %126 = vector.load %arg0[%125, %c0_30, %c0_31] : memref<8x8x128xf32, #tpu.memory_space<vmem>>, vector<1x8x128xf32>
    %127 = vector.shape_cast %126 : vector<1x8x128xf32> to vector<8x128xf32>
    %cst_32 = arith.constant dense<0.000000e+00> : vector<8x128xf32>
    %128 = tpu.matmul %124, %0, %cst_32 {dimension_numbers = #tpu.dot_dimension_numbers<[1], [0], [0], [1], [0, 0, 1, 1], [], []>} : vector<8x32xf32>, vector<32x128xf32>, vector<8x128xf32> -> vector<8x128xf32>
    %129 = arith.addf %127, %128 : vector<8x128xf32>
    %130 = arith.negf %129 : vector<8x128xf32>
    %131 = math.exp %130 : vector<8x128xf32>
    %cst_33 = arith.constant 1.000000e+00 : f32
    %132 = vector.broadcast %cst_33 : f32 to vector<8x128xf32>
    %133 = arith.addf %132, %131 : vector<8x128xf32>
    %134 = arith.divf %132, %133 : vector<8x128xf32>
    %135 = math.tanh %129 : vector<8x128xf32>
    %136 = vector.extract_strided_slice %134 {offsets = [0, 0], sizes = [8, 32], strides = [1, 1]} : vector<8x128xf32> to vector<8x32xf32>
    %137 = vector.extract_strided_slice %134 {offsets = [0, 32], sizes = [8, 32], strides = [1, 1]} : vector<8x128xf32> to vector<8x32xf32>
    %138 = vector.extract_strided_slice %135 {offsets = [0, 64], sizes = [8, 32], strides = [1, 1]} : vector<8x128xf32> to vector<8x32xf32>
    %139 = vector.extract_strided_slice %134 {offsets = [0, 96], sizes = [8, 32], strides = [1, 1]} : vector<8x128xf32> to vector<8x32xf32>
    %140 = arith.mulf %137, %122 : vector<8x32xf32>
    %141 = arith.mulf %136, %138 : vector<8x32xf32>
    %142 = arith.addf %140, %141 : vector<8x32xf32>
    %143 = math.tanh %142 : vector<8x32xf32>
    %144 = arith.mulf %139, %143 : vector<8x32xf32>
    %c7_i32 = arith.constant 7 : i32
    %145 = arith.index_cast %c7_i32 : i32 to index
    %c0_34 = arith.constant 0 : index
    %c0_35 = arith.constant 0 : index
    %146 = vector.load %arg0[%145, %c0_34, %c0_35] : memref<8x8x128xf32, #tpu.memory_space<vmem>>, vector<1x8x128xf32>
    %147 = vector.shape_cast %146 : vector<1x8x128xf32> to vector<8x128xf32>
    %cst_36 = arith.constant dense<0.000000e+00> : vector<8x128xf32>
    %148 = tpu.matmul %144, %0, %cst_36 {dimension_numbers = #tpu.dot_dimension_numbers<[1], [0], [0], [1], [0, 0, 1, 1], [], []>} : vector<8x32xf32>, vector<32x128xf32>, vector<8x128xf32> -> vector<8x128xf32>
    %149 = arith.addf %147, %148 : vector<8x128xf32>
    %150 = arith.negf %149 : vector<8x128xf32>
    %151 = math.exp %150 : vector<8x128xf32>
    %cst_37 = arith.constant 1.000000e+00 : f32
    %152 = vector.broadcast %cst_37 : f32 to vector<8x128xf32>
    %153 = arith.addf %152, %151 : vector<8x128xf32>
    %154 = arith.divf %152, %153 : vector<8x128xf32>
    %155 = math.tanh %149 : vector<8x128xf32>
    %156 = vector.extract_strided_slice %154 {offsets = [0, 0], sizes = [8, 32], strides = [1, 1]} : vector<8x128xf32> to vector<8x32xf32>
    %157 = vector.extract_strided_slice %154 {offsets = [0, 32], sizes = [8, 32], strides = [1, 1]} : vector<8x128xf32> to vector<8x32xf32>
    %158 = vector.extract_strided_slice %155 {offsets = [0, 64], sizes = [8, 32], strides = [1, 1]} : vector<8x128xf32> to vector<8x32xf32>
    %159 = vector.extract_strided_slice %154 {offsets = [0, 96], sizes = [8, 32], strides = [1, 1]} : vector<8x128xf32> to vector<8x32xf32>
    %160 = arith.mulf %157, %142 : vector<8x32xf32>
    %161 = arith.mulf %156, %158 : vector<8x32xf32>
    %162 = arith.addf %160, %161 : vector<8x32xf32>
    %163 = math.tanh %162 : vector<8x32xf32>
    %164 = arith.mulf %159, %163 : vector<8x32xf32>
    %c8_i32 = arith.constant 8 : i32
    %cst_38 = arith.constant dense<0.000000e+00> : vector<8x128xf32>
    %165 = tpu.matmul %164, %1, %cst_38 {dimension_numbers = #tpu.dot_dimension_numbers<[1], [0], [0], [1], [0, 0, 1, 1], [], []>} : vector<8x32xf32>, vector<32x128xf32>, vector<8x128xf32> -> vector<8x128xf32>
    %166 = vector.broadcast %2 : vector<1x128xf32> to vector<8x128xf32>
    %167 = arith.addf %165, %166 : vector<8x128xf32>
    %c0_39 = arith.constant 0 : index
    %c0_40 = arith.constant 0 : index
    %168 = vector.load %arg4[%c0_39, %c0_40] : memref<8x128xf32, #tpu.memory_space<vmem>>, vector<8x128xf32>
    tpu.vector_store %arg4[%c0_39, %c0_40], %167 {strides = array<i32>} : memref<8x128xf32, #tpu.memory_space<vmem>>, vector<8x128xf32>,
    return
  }
}

</mosaic_0001>

<llo_original>
// kernel: text_rnn_forward.1
$region0: #{text_rnn_forward.1}
  #allocation0 [shape = 'u32[]', space=smem, size = 0x4, offset = 0x4, fixed_abs, tag = 'smem constant byte address 0x4 - core index']
  #allocation1 [shape = 'u32[144,128]{1,0:T(1,128)}', space=vmem, size = 0x12000, scoped, tag = 'internal scratch']
  %s0 = inlined_call_operand.vmem [shape: f32[8,8,128], index: 0, kind: input, shape index: {}]
  %s1 = inlined_call_operand.vmem [shape: f32[32,128], index: 1, kind: input, shape index: {}]
  %s2 = inlined_call_operand.vmem [shape: f32[32,128], index: 2, kind: input, shape index: {}]
  %s3 = inlined_call_operand.vmem [shape: f32[1,128], index: 3, kind: input, shape index: {}]
  %s4 = inlined_call_operand.vmem [shape: f32[8,128], index: 4, kind: output, shape index: {}]
  %s5 = sld [smem:[#allocation0]]
  $region26: #{text_rnn_forward.1} parent=0
    _
  %s7 = ssub.s32 1, %s5
  %s8 = scalar_select 0, %s7, %s5
  // Predicated region
  $region2: #{text_rnn_forward.1} parent=0 // pred_check
    _
  $region3: #{text_rnn_forward.1} parent=0 // pred_check_branch
    %10 = sbr.rel (0) target = $region5
  $region4: #{text_rnn_forward.1} parent=0 // pred_region
    _
  $region5: #{text_rnn_forward.1} parent=0 // pred_fallthru
    _
  // Predicated region
  $region6: #{text_rnn_forward.1} parent=0 // pred_check
    _
  $region7: #{text_rnn_forward.1} parent=0 // pred_check_branch
    %12 = sbr.rel (0) target = $region9
  $region8: #{text_rnn_forward.1} parent=0 // pred_region
    _
  $region9: #{text_rnn_forward.1} parent=0 // pred_fallthru
    _
  // Predicated region
  $region10: #{text_rnn_forward.1} parent=0 // pred_check
    _
  $region11: #{text_rnn_forward.1} parent=0 // pred_check_branch
    %14 = sbr.rel (0) target = $region13
  $region12: #{text_rnn_forward.1} parent=0 // pred_region
    _
  $region13: #{text_rnn_forward.1} parent=0 // pred_fallthru
    _
  // Predicated region
  $region14: #{text_rnn_forward.1} parent=0 // pred_check
    _
  $region15: #{text_rnn_forward.1} parent=0 // pred_check_branch
    %16 = sbr.rel (0) target = $region17
  $region16: #{text_rnn_forward.1} parent=0 // pred_region
    _
  $region17: #{text_rnn_forward.1} parent=0 // pred_fallthru
    _
  %v17 = vld [vmem:[%s1] sm:$0xff]
  %v18 = vld [vmem:[%s1 + $0x8] sm:$0xff]
  %v19 = vld [vmem:[%s1 + $0x10] sm:$0xff]
  %v20 = vld [vmem:[%s1 + $0x18] sm:$0xff]
  %v21 = vld [vmem:[%s2] sm:$0xff]
  %v22 = vld [vmem:[%s2 + $0x8] sm:$0xff]
  %v23 = vld [vmem:[%s2 + $0x10] sm:$0xff]
  %v24 = vld [vmem:[%s2 + $0x18] sm:$0xff]
  %v25 = vld [vmem:[%s3] sm:$0x1]
  %v26 = vld [vmem:[%s0] sm:$0xff]
  %vm27 = vcmask 261120
  %v29 = vsel %vm27, 0.0, 0
  %31 = vmatprep.subr.mxu0 0.0
  %32 = vmatpush1.msra.mxu0 0.0
  %33 = vmatprep.subr.mxu0 0.0
  %34 = vmatpush1.msra.mxu0 0.0
  %35 = vmatprep.subr.mxu0 0.0
  %36 = vmatpush1.msra.mxu0 0.0
  %37 = vmatprep.subr.mxu0 0.0
  %38 = vmatpush1.msra.mxu0 0.0
  %39 = vmatprep.subr.mxu0 0.0
  %40 = vmatpush1.msra.mxu0 0.0
  %41 = vmatprep.subr.mxu0 0.0
  %42 = vmatpush1.msra.mxu0 0.0
  %43 = vmatprep.subr.mxu0 0.0
  %44 = vmatpush1.msra.mxu0 0.0
  %45 = vmatprep.subr.mxu0 0.0
  %46 = vmatpush1.msra.mxu0 0.0
  %47 = vmatprep.subr.mxu0 0.0
  %48 = vmatpush1.msra.mxu0 0.0
  %49 = vmatprep.subr.mxu0 0.0
  %50 = vmatpush1.msra.mxu0 0.0
  %51 = vmatprep.subr.mxu0 0.0
  %52 = vmatpush1.msra.mxu0 0.0
  %53 = vmatprep.subr.mxu0 0.0
  %54 = vmatpush1.msra.mxu0 0.0
  %55 = vmatprep.subr.mxu0 0.0
  %56 = vmatpush1.msra.mxu0 %v20
  %57 = vmatprep.subr.mxu0 0.0
  %58 = vmatpush1.msra.mxu0 %v19
  %59 = vmatprep.subr.mxu0 0.0
  %60 = vmatpush1.msra.mxu0 %v18
  %61 = vmatprep.subr.mxu0 0.0
  %62 = vmatpush1.msra.mxu0 %v17
  %63 = vmatprep.subr.mxu0 0.0
  %64 = vmatpush2.msra.mxu0 0.0
  %65 = vmatprep.subr.mxu0 0.0
  %66 = vmatpush2.msra.mxu0 0.0
  %67 = vmatprep.subr.mxu0 0.0
  %68 = vmatpush2.msra.mxu0 0.0
  %69 = vmatprep.subr.mxu0 0.0
  %70 = vmatpush2.msra.mxu0 0.0
  %71 = vmatprep.subr.mxu0 0.0
  %72 = vmatpush2.msra.mxu0 0.0
  %73 = vmatprep.subr.mxu0 0.0
  %74 = vmatpush2.msra.mxu0 0.0
  %75 = vmatprep.subr.mxu0 0.0
  %76 = vmatpush2.msra.mxu0 0.0
  %77 = vmatprep.subr.mxu0 0.0
  %78 = vmatpush2.msra.mxu0 0.0
  %79 = vmatprep.subr.mxu0 0.0
  %80 = vmatpush2.msra.mxu0 0.0
  %81 = vmatprep.subr.mxu0 0.0
  %82 = vmatpush2.msra.mxu0 0.0
  %83 = vmatprep.subr.mxu0 0.0
  %84 = vmatpush2.msra.mxu0 0.0
  %85 = vmatprep.subr.mxu0 0.0
  %86 = vmatpush2.msra.mxu0 0.0
  %87 = vmatprep.subr.mxu0 0.0
  %88 = vmatpush2.msra.mxu0 0.0
  %89 = vmatprep.subr.mxu0 0.0
  %90 = vmatpush2.msra.mxu0 0.0
  %91 = vmatprep.subr.mxu0 0.0
  %92 = vmatpush2.msra.mxu0 0.0
  %93 = vmatprep.subr.mxu0 0.0
  %94 = vmatpush2.msra.mxu0 0.0
  %95 = vmatprep.mubr.f32.mxu0 0.0
  %96 = vmatmul.mubr.f32.gmra.mxu0 %v29
  %v97 = vpop.f32.mrf.mxu0
  %v98 = vadd.f32 0.0, %v97
  %v99 = vpop.f32.mrf.mxu0
  %100 = vdwg.mxu0
  %v101 = vadd.f32 %v26, %v98
  %v102 = vxor.u32 %v101, 2147483648
  %v103 = vmul.f32 %v102, 1.442695
  %v104 = vpow.pop %v103
  %v105 = vadd.f32 %v104, 1.0
  %v106 = vrcp.pop %v105
  %v107 = vmul.f32 1.0, %v106
  %v108 = vtanh.pop %v101
  %v109 = vmul.f32 %v107, 0.0
  %111 = vrot.lane.b32.xlu0 %v108, 64
  %v112 = vpop.permute.xlu0 %111
  %v114 = vmul.f32 %v107, %v112
  %116 = vrot.lane.b32.xlu0 %v114, 32
  %v117 = vpop.permute.xlu0 %116
  %v119 = vadd.f32 %v109, %v117
  %v120 = vtanh.pop %v119
  %122 = vrot.lane.b32.xlu0 %v120, 64
  %v123 = vpop.permute.xlu0 %122
  %v125 = vmul.f32 %v107, %v123
  %s126 = scalar_lea.vmem %s0, 8
  %v127 = vld [vmem:[%s126] sm:$0xff]
  %129 = vrot.lane.b32.xlu0 %v125, 32
  %v130 = vpop.permute.xlu0 %129
  %v131 = vsel %vm27, %v130, 0
  %133 = vmatprep.subr.mxu0 0.0
  %134 = vmatpush1.msra.mxu0 0.0
  %135 = vmatprep.subr.mxu0 0.0
  %136 = vmatpush1.msra.mxu0 0.0
  %137 = vmatprep.subr.mxu0 0.0
  %138 = vmatpush1.msra.mxu0 0.0
  %139 = vmatprep.subr.mxu0 0.0
  %140 = vmatpush1.msra.mxu0 0.0
  %141 = vmatprep.subr.mxu0 0.0
  %142 = vmatpush1.msra.mxu0 0.0
  %143 = vmatprep.subr.mxu0 0.0
  %144 = vmatpush1.msra.mxu0 0.0
  %145 = vmatprep.subr.mxu0 0.0
  %146 = vmatpush1.msra.mxu0 0.0
  %147 = vmatprep.subr.mxu0 0.0
  %148 = vmatpush1.msra.mxu0 0.0
  %149 = vmatprep.subr.mxu0 0.0
  %150 = vmatpush1.msra.mxu0 0.0
  %151 = vmatprep.subr.mxu0 0.0
  %152 = vmatpush1.msra.mxu0 0.0
  %153 = vmatprep.subr.mxu0 0.0
  %154 = vmatpush1.msra.mxu0 0.0
  %155 = vmatprep.subr.mxu0 0.0
  %156 = vmatpush1.msra.mxu0 0.0
  %157 = vmatprep.subr.mxu0 0.0
  %158 = vmatpush1.msra.mxu0 %v20
  %159 = vmatprep.subr.mxu0 0.0
  %160 = vmatpush1.msra.mxu0 %v19
  %161 = vmatprep.subr.mxu0 0.0
  %162 = vmatpush1.msra.mxu0 %v18
  %163 = vmatprep.subr.mxu0 0.0
  %164 = vmatpush1.msra.mxu0 %v17
  %165 = vmatprep.subr.mxu0 0.0
  %166 = vmatpush2.msra.mxu0 0.0
  %167 = vmatprep.subr.mxu0 0.0
  %168 = vmatpush2.msra.mxu0 0.0
  %169 = vmatprep.subr.mxu0 0.0
  %170 = vmatpush2.msra.mxu0 0.0
  %171 = vmatprep.subr.mxu0 0.0
  %172 = vmatpush2.msra.mxu0 0.0
  %173 = vmatprep.subr.mxu0 0.0
  %174 = vmatpush2.msra.mxu0 0.0
  %175 = vmatprep.subr.mxu0 0.0
  %176 = vmatpush2.msra.mxu0 0.0
  %177 = vmatprep.subr.mxu0 0.0
  %178 = vmatpush2.msra.mxu0 0.0
  %179 = vmatprep.subr.mxu0 0.0
  %180 = vmatpush2.msra.mxu0 0.0
  %181 = vmatprep.subr.mxu0 0.0
  %182 = vmatpush2.msra.mxu0 0.0
  %183 = vmatprep.subr.mxu0 0.0
  %184 = vmatpush2.msra.mxu0 0.0
  %185 = vmatprep.subr.mxu0 0.0
  %186 = vmatpush2.msra.mxu0 0.0
  %187 = vmatprep.subr.mxu0 0.0
  %188 = vmatpush2.msra.mxu0 0.0
  %189 = vmatprep.subr.mxu0 0.0
  %190 = vmatpush2.msra.mxu0 0.0
  %191 = vmatprep.subr.mxu0 0.0
  %192 = vmatpush2.msra.mxu0 0.0
  %193 = vmatprep.subr.mxu0 0.0
  %194 = vmatpush2.msra.mxu0 0.0
  %195 = vmatprep.subr.mxu0 0.0
  %196 = vmatpush2.msra.mxu0 0.0
  %197 = vmatprep.mubr.f32.mxu0 0.0
  %198 = vmatmul.mubr.f32.gmra.mxu0 %v131
  %v199 = vpop.f32.mrf.mxu0
  %v200 = vadd.f32 0.0, %v199
  %v201 = vpop.f32.mrf.mxu0
  %202 = vdwg.mxu0
  %v203 = vadd.f32 %v127, %v200
  %v204 = vxor.u32 %v203, 2147483648
  %v205 = vmul.f32 %v204, 1.442695
  %v206 = vpow.pop %v205
  %v207 = vadd.f32 %v206, 1.0
  %v208 = vrcp.pop %v207
  %v209 = vmul.f32 1.0, %v208
  %v210 = vtanh.pop %v203
  %v211 = vmul.f32 %v209, %v119
  %213 = vrot.lane.b32.xlu0 %v210, 64
  %v214 = vpop.permute.xlu0 %213
  %v216 = vmul.f32 %v209, %v214
  %218 = vrot.lane.b32.xlu0 %v216, 32
  %v219 = vpop.permute.xlu0 %218
  %v221 = vadd.f32 %v211, %v219
  %v222 = vtanh.pop %v221
  %224 = vrot.lane.b32.xlu0 %v222, 64
  %v225 = vpop.permute.xlu0 %224
  %v227 = vmul.f32 %v209, %v225
  %s228 = scalar_lea.vmem %s0, 16
  %v229 = vld [vmem:[%s228] sm:$0xff]
  %231 = vrot.lane.b32.xlu0 %v227, 32
  %v232 = vpop.permute.xlu0 %231
  %v233 = vsel %vm27, %v232, 0
  %235 = vmatprep.subr.mxu0 0.0
  %236 = vmatpush1.msra.mxu0 0.0
  %237 = vmatprep.subr.mxu0 0.0
  %238 = vmatpush1.msra.mxu0 0.0
  %239 = vmatprep.subr.mxu0 0.0
  %240 = vmatpush1.msra.mxu0 0.0
  %241 = vmatprep.subr.mxu0 0.0
  %242 = vmatpush1.msra.mxu0 0.0
  %243 = vmatprep.subr.mxu0 0.0
  %244 = vmatpush1.msra.mxu0 0.0
  %245 = vmatprep.subr.mxu0 0.0
  %246 = vmatpush1.msra.mxu0 0.0
  %247 = vmatprep.subr.mxu0 0.0
  %248 = vmatpush1.msra.mxu0 0.0
  %249 = vmatprep.subr.mxu0 0.0
  %250 = vmatpush1.msra.mxu0 0.0
  %251 = vmatprep.subr.mxu0 0.0
  %252 = vmatpush1.msra.mxu0 0.0
  %253 = vmatprep.subr.mxu0 0.0
  %254 = vmatpush1.msra.mxu0 0.0
  %255 = vmatprep.subr.mxu0 0.0
  %256 = vmatpush1.msra.mxu0 0.0
  %257 = vmatprep.subr.mxu0 0.0
  %258 = vmatpush1.msra.mxu0 0.0
  %259 = vmatprep.subr.mxu0 0.0
  %260 = vmatpush1.msra.mxu0 %v20
  %261 = vmatprep.subr.mxu0 0.0
  %262 = vmatpush1.msra.mxu0 %v19
  %263 = vmatprep.subr.mxu0 0.0
  %264 = vmatpush1.msra.mxu0 %v18
  %265 = vmatprep.subr.mxu0 0.0
  %266 = vmatpush1.msra.mxu0 %v17
  %267 = vmatprep.subr.mxu0 0.0
  %268 = vmatpush2.msra.mxu0 0.0
  %269 = vmatprep.subr.mxu0 0.0
  %270 = vmatpush2.msra.mxu0 0.0
  %271 = vmatprep.subr.mxu0 0.0
  %272 = vmatpush2.msra.mxu0 0.0
  %273 = vmatprep.subr.mxu0 0.0
  %274 = vmatpush2.msra.mxu0 0.0
  %275 = vmatprep.subr.mxu0 0.0
  %276 = vmatpush2.msra.mxu0 0.0
  %277 = vmatprep.subr.mxu0 0.0
  %278 = vmatpush2.msra.mxu0 0.0
  %279 = vmatprep.subr.mxu0 0.0
  %280 = vmatpush2.msra.mxu0 0.0
  %281 = vmatprep.subr.mxu0 0.0
  %282 = vmatpush2.msra.mxu0 0.0
  %283 = vmatprep.subr.mxu0 0.0
  %284 = vmatpush2.msra.mxu0 0.0
  %285 = vmatprep.subr.mxu0 0.0
  %286 = vmatpush2.msra.mxu0 0.0
  %287 = vmatprep.subr.mxu0 0.0
  %288 = vmatpush2.msra.mxu0 0.0
  %289 = vmatprep.subr.mxu0 0.0
  %290 = vmatpush2.msra.mxu0 0.0
  %291 = vmatprep.subr.mxu0 0.0
  %292 = vmatpush2.msra.mxu0 0.0
  %293 = vmatprep.subr.mxu0 0.0
  %294 = vmatpush2.msra.mxu0 0.0
  %295 = vmatprep.subr.mxu0 0.0
  %296 = vmatpush2.msra.mxu0 0.0
  %297 = vmatprep.subr.mxu0 0.0
  %298 = vmatpush2.msra.mxu0 0.0
  %299 = vmatprep.mubr.f32.mxu0 0.0
  %300 = vmatmul.mubr.f32.gmra.mxu0 %v233
  %v301 = vpop.f32.mrf.mxu0
  %v302 = vadd.f32 0.0, %v301
  %v303 = vpop.f32.mrf.mxu0
  %304 = vdwg.mxu0
  %v305 = vadd.f32 %v229, %v302
  %v306 = vxor.u32 %v305, 2147483648
  %v307 = vmul.f32 %v306, 1.442695
  %v308 = vpow.pop %v307
  %v309 = vadd.f32 %v308, 1.0
  %v310 = vrcp.pop %v309
  %v311 = vmul.f32 1.0, %v310
  %v312 = vtanh.pop %v305
  %v313 = vmul.f32 %v311, %v221
  %315 = vrot.lane.b32.xlu0 %v312, 64
  %v316 = vpop.permute.xlu0 %315
  %v318 = vmul.f32 %v311, %v316
  %320 = vrot.lane.b32.xlu0 %v318, 32
  %v321 = vpop.permute.xlu0 %320
  %v323 = vadd.f32 %v313, %v321
  %v324 = vtanh.pop %v323
  %326 = vrot.lane.b32.xlu0 %v324, 64
  %v327 = vpop.permute.xlu0 %326
  %v329 = vmul.f32 %v311, %v327
  %s330 = scalar_lea.vmem %s0, 24
  %v331 = vld [vmem:[%s330] sm:$0xff]
  %333 = vrot.lane.b32.xlu0 %v329, 32
  %v334 = vpop.permute.xlu0 %333
  %v335 = vsel %vm27, %v334, 0
  %337 = vmatprep.subr.mxu0 0.0
  %338 = vmatpush1.msra.mxu0 0.0
  %339 = vmatprep.subr.mxu0 0.0
  %340 = vmatpush1.msra.mxu0 0.0
  %341 = vmatprep.subr.mxu0 0.0
  %342 = vmatpush1.msra.mxu0 0.0
  %343 = vmatprep.subr.mxu0 0.0
  %344 = vmatpush1.msra.mxu0 0.0
  %345 = vmatprep.subr.mxu0 0.0
  %346 = vmatpush1.msra.mxu0 0.0
  %347 = vmatprep.subr.mxu0 0.0
  %348 = vmatpush1.msra.mxu0 0.0
  %349 = vmatprep.subr.mxu0 0.0
  %350 = vmatpush1.msra.mxu0 0.0
  %351 = vmatprep.subr.mxu0 0.0
  %352 = vmatpush1.msra.mxu0 0.0
  %353 = vmatprep.subr.mxu0 0.0
  %354 = vmatpush1.msra.mxu0 0.0
  %355 = vmatprep.subr.mxu0 0.0
  %356 = vmatpush1.msra.mxu0 0.0
  %357 = vmatprep.subr.mxu0 0.0
  %358 = vmatpush1.msra.mxu0 0.0
  %359 = vmatprep.subr.mxu0 0.0
  %360 = vmatpush1.msra.mxu0 0.0
  %361 = vmatprep.subr.mxu0 0.0
  %362 = vmatpush1.msra.mxu0 %v20
  %363 = vmatprep.subr.mxu0 0.0
  %364 = vmatpush1.msra.mxu0 %v19
  %365 = vmatprep.subr.mxu0 0.0
  %366 = vmatpush1.msra.mxu0 %v18
  %367 = vmatprep.subr.mxu0 0.0
  %368 = vmatpush1.msra.mxu0 %v17
  %369 = vmatprep.subr.mxu0 0.0
  %370 = vmatpush2.msra.mxu0 0.0
  %371 = vmatprep.subr.mxu0 0.0
  %372 = vmatpush2.msra.mxu0 0.0
  %373 = vmatprep.subr.mxu0 0.0
  %374 = vmatpush2.msra.mxu0 0.0
  %375 = vmatprep.subr.mxu0 0.0
  %376 = vmatpush2.msra.mxu0 0.0
  %377 = vmatprep.subr.mxu0 0.0
  %378 = vmatpush2.msra.mxu0 0.0
  %379 = vmatprep.subr.mxu0 0.0
  %380 = vmatpush2.msra.mxu0 0.0
  %381 = vmatprep.subr.mxu0 0.0
  %382 = vmatpush2.msra.mxu0 0.0
  %383 = vmatprep.subr.mxu0 0.0
  %384 = vmatpush2.msra.mxu0 0.0
  %385 = vmatprep.subr.mxu0 0.0
  %386 = vmatpush2.msra.mxu0 0.0
  %387 = vmatprep.subr.mxu0 0.0
  %388 = vmatpush2.msra.mxu0 0.0
  %389 = vmatprep.subr.mxu0 0.0
  %390 = vmatpush2.msra.mxu0 0.0
  %391 = vmatprep.subr.mxu0 0.0
  %392 = vmatpush2.msra.mxu0 0.0
  %393 = vmatprep.subr.mxu0 0.0
  %394 = vmatpush2.msra.mxu0 0.0
  %395 = vmatprep.subr.mxu0 0.0
  %396 = vmatpush2.msra.mxu0 0.0
  %397 = vmatprep.subr.mxu0 0.0
  %398 = vmatpush2.msra.mxu0 0.0
  %399 = vmatprep.subr.mxu0 0.0
  %400 = vmatpush2.msra.mxu0 0.0
  %401 = vmatprep.mubr.f32.mxu0 0.0
  %402 = vmatmul.mubr.f32.gmra.mxu0 %v335
  %v403 = vpop.f32.mrf.mxu0
  %v404 = vadd.f32 0.0, %v403
  %v405 = vpop.f32.mrf.mxu0
  %406 = vdwg.mxu0
  %v407 = vadd.f32 %v331, %v404
  %v408 = vxor.u32 %v407, 2147483648
  %v409 = vmul.f32 %v408, 1.442695
  %v410 = vpow.pop %v409
  %v411 = vadd.f32 %v410, 1.0
  %v412 = vrcp.pop %v411
  %v413 = vmul.f32 1.0, %v412
  %v414 = vtanh.pop %v407
  %v415 = vmul.f32 %v413, %v323
  %417 = vrot.lane.b32.xlu0 %v414, 64
  %v418 = vpop.permute.xlu0 %417
  %v420 = vmul.f32 %v413, %v418
  %422 = vrot.lane.b32.xlu0 %v420, 32
  %v423 = vpop.permute.xlu0 %422
  %v425 = vadd.f32 %v415, %v423
  %v426 = vtanh.pop %v425
  %428 = vrot.lane.b32.xlu0 %v426, 64
  %v429 = vpop.permute.xlu0 %428
  %v431 = vmul.f32 %v413, %v429
  %s432 = scalar_lea.vmem %s0, 32
  %v433 = vld [vmem:[%s432] sm:$0xff]
  %435 = vrot.lane.b32.xlu0 %v431, 32
  %v436 = vpop.permute.xlu0 %435
  %v437 = vsel %vm27, %v436, 0
  %439 = vmatprep.subr.mxu0 0.0
  %440 = vmatpush1.msra.mxu0 0.0
  %441 = vmatprep.subr.mxu0 0.0
  %442 = vmatpush1.msra.mxu0 0.0
  %443 = vmatprep.subr.mxu0 0.0
  %444 = vmatpush1.msra.mxu0 0.0
  %445 = vmatprep.subr.mxu0 0.0
  %446 = vmatpush1.msra.mxu0 0.0
  %447 = vmatprep.subr.mxu0 0.0
  %448 = vmatpush1.msra.mxu0 0.0
  %449 = vmatprep.subr.mxu0 0.0
  %450 = vmatpush1.msra.mxu0 0.0
  %451 = vmatprep.subr.mxu0 0.0
  %452 = vmatpush1.msra.mxu0 0.0
  %453 = vmatprep.subr.mxu0 0.0
  %454 = vmatpush1.msra.mxu0 0.0
  %455 = vmatprep.subr.mxu0 0.0
  %456 = vmatpush1.msra.mxu0 0.0
  %457 = vmatprep.subr.mxu0 0.0
  %458 = vmatpush1.msra.mxu0 0.0
  %459 = vmatprep.subr.mxu0 0.0
  %460 = vmatpush1.msra.mxu0 0.0
  %461 = vmatprep.subr.mxu0 0.0
  %462 = vmatpush1.msra.mxu0 0.0
  %463 = vmatprep.subr.mxu0 0.0
  %464 = vmatpush1.msra.mxu0 %v20
  %465 = vmatprep.subr.mxu0 0.0
  %466 = vmatpush1.msra.mxu0 %v19
  %467 = vmatprep.subr.mxu0 0.0
  %468 = vmatpush1.msra.mxu0 %v18
  %469 = vmatprep.subr.mxu0 0.0
  %470 = vmatpush1.msra.mxu0 %v17
  %471 = vmatprep.subr.mxu0 0.0
  %472 = vmatpush2.msra.mxu0 0.0
  %473 = vmatprep.subr.mxu0 0.0
  %474 = vmatpush2.msra.mxu0 0.0
  %475 = vmatprep.subr.mxu0 0.0
  %476 = vmatpush2.msra.mxu0 0.0
  %477 = vmatprep.subr.mxu0 0.0
  %478 = vmatpush2.msra.mxu0 0.0
  %479 = vmatprep.subr.mxu0 0.0
  %480 = vmatpush2.msra.mxu0 0.0
  %481 = vmatprep.subr.mxu0 0.0
  %482 = vmatpush2.msra.mxu0 0.0
  %483 = vmatprep.subr.mxu0 0.0
  %484 = vmatpush2.msra.mxu0 0.0
  %485 = vmatprep.subr.mxu0 0.0
  %486 = vmatpush2.msra.mxu0 0.0
  %487 = vmatprep.subr.mxu0 0.0
  %488 = vmatpush2.msra.mxu0 0.0
  %489 = vmatprep.subr.mxu0 0.0
  %490 = vmatpush2.msra.mxu0 0.0
  %491 = vmatprep.subr.mxu0 0.0
  %492 = vmatpush2.msra.mxu0 0.0
  %493 = vmatprep.subr.mxu0 0.0
  %494 = vmatpush2.msra.mxu0 0.0
  %495 = vmatprep.subr.mxu0 0.0
  %496 = vmatpush2.msra.mxu0 0.0
  %497 = vmatprep.subr.mxu0 0.0
  %498 = vmatpush2.msra.mxu0 0.0
  %499 = vmatprep.subr.mxu0 0.0
  %500 = vmatpush2.msra.mxu0 0.0
  %501 = vmatprep.subr.mxu0 0.0
  %502 = vmatpush2.msra.mxu0 0.0
  %503 = vmatprep.mubr.f32.mxu0 0.0
  %504 = vmatmul.mubr.f32.gmra.mxu0 %v437
  %v505 = vpop.f32.mrf.mxu0
  %v506 = vadd.f32 0.0, %v505
  %v507 = vpop.f32.mrf.mxu0
  %508 = vdwg.mxu0
  %v509 = vadd.f32 %v433, %v506
  %v510 = vxor.u32 %v509, 2147483648
  %v511 = vmul.f32 %v510, 1.442695
  %v512 = vpow.pop %v511
  %v513 = vadd.f32 %v512, 1.0
  %v514 = vrcp.pop %v513
  %v515 = vmul.f32 1.0, %v514
  %v516 = vtanh.pop %v509
  %v517 = vmul.f32 %v515, %v425
  %519 = vrot.lane.b32.xlu0 %v516, 64
  %v520 = vpop.permute.xlu0 %519
  %v522 = vmul.f32 %v515, %v520
  %524 = vrot.lane.b32.xlu0 %v522, 32
  %v525 = vpop.permute.xlu0 %524
  %v527 = vadd.f32 %v517, %v525
  %v528 = vtanh.pop %v527
  %530 = vrot.lane.b32.xlu0 %v528, 64
  %v531 = vpop.permute.xlu0 %530
  %v533 = vmul.f32 %v515, %v531
  %s534 = scalar_lea.vmem %s0, 40
  %v535 = vld [vmem:[%s534] sm:$0xff]
  %537 = vrot.lane.b32.xlu0 %v533, 32
  %v538 = vpop.permute.xlu0 %537
  %v539 = vsel %vm27, %v538, 0
  %541 = vmatprep.subr.mxu0 0.0
  %542 = vmatpush1.msra.mxu0 0.0
  %543 = vmatprep.subr.mxu0 0.0
  %544 = vmatpush1.msra.mxu0 0.0
  %545 = vmatprep.subr.mxu0 0.0
  %546 = vmatpush1.msra.mxu0 0.0
  %547 = vmatprep.subr.mxu0 0.0
  %548 = vmatpush1.msra.mxu0 0.0
  %549 = vmatprep.subr.mxu0 0.0
  %550 = vmatpush1.msra.mxu0 0.0
  %551 = vmatprep.subr.mxu0 0.0
  %552 = vmatpush1.msra.mxu0 0.0
  %553 = vmatprep.subr.mxu0 0.0
  %554 = vmatpush1.msra.mxu0 0.0
  %555 = vmatprep.subr.mxu0 0.0
  %556 = vmatpush1.msra.mxu0 0.0
  %557 = vmatprep.subr.mxu0 0.0
  %558 = vmatpush1.msra.mxu0 0.0
  %559 = vmatprep.subr.mxu0 0.0
  %560 = vmatpush1.msra.mxu0 0.0
  %561 = vmatprep.subr.mxu0 0.0
  %562 = vmatpush1.msra.mxu0 0.0
  %563 = vmatprep.subr.mxu0 0.0
  %564 = vmatpush1.msra.mxu0 0.0
  %565 = vmatprep.subr.mxu0 0.0
  %566 = vmatpush1.msra.mxu0 %v20
  %567 = vmatprep.subr.mxu0 0.0
  %568 = vmatpush1.msra.mxu0 %v19
  %569 = vmatprep.subr.mxu0 0.0
  %570 = vmatpush1.msra.mxu0 %v18
  %571 = vmatprep.subr.mxu0 0.0
  %572 = vmatpush1.msra.mxu0 %v17
  %573 = vmatprep.subr.mxu0 0.0
  %574 = vmatpush2.msra.mxu0 0.0
  %575 = vmatprep.subr.mxu0 0.0
  %576 = vmatpush2.msra.mxu0 0.0
  %577 = vmatprep.subr.mxu0 0.0
  %578 = vmatpush2.msra.mxu0 0.0
  %579 = vmatprep.subr.mxu0 0.0
  %580 = vmatpush2.msra.mxu0 0.0
  %581 = vmatprep.subr.mxu0 0.0
  %582 = vmatpush2.msra.mxu0 0.0
  %583 = vmatprep.subr.mxu0 0.0
  %584 = vmatpush2.msra.mxu0 0.0
  %585 = vmatprep.subr.mxu0 0.0
  %586 = vmatpush2.msra.mxu0 0.0
  %587 = vmatprep.subr.mxu0 0.0
  %588 = vmatpush2.msra.mxu0 0.0
  %589 = vmatprep.subr.mxu0 0.0
  %590 = vmatpush2.msra.mxu0 0.0
  %591 = vmatprep.subr.mxu0 0.0
  %592 = vmatpush2.msra.mxu0 0.0
  %593 = vmatprep.subr.mxu0 0.0
  %594 = vmatpush2.msra.mxu0 0.0
  %595 = vmatprep.subr.mxu0 0.0
  %596 = vmatpush2.msra.mxu0 0.0
  %597 = vmatprep.subr.mxu0 0.0
  %598 = vmatpush2.msra.mxu0 0.0
  %599 = vmatprep.subr.mxu0 0.0
  %600 = vmatpush2.msra.mxu0 0.0
  %601 = vmatprep.subr.mxu0 0.0
  %602 = vmatpush2.msra.mxu0 0.0
  %603 = vmatprep.subr.mxu0 0.0
  %604 = vmatpush2.msra.mxu0 0.0
  %605 = vmatprep.mubr.f32.mxu0 0.0
  %606 = vmatmul.mubr.f32.gmra.mxu0 %v539
  %v607 = vpop.f32.mrf.mxu0
  %v608 = vadd.f32 0.0, %v607
  %v609 = vpop.f32.mrf.mxu0
  %610 = vdwg.mxu0
  %v611 = vadd.f32 %v535, %v608
  %v612 = vxor.u32 %v611, 2147483648
  %v613 = vmul.f32 %v612, 1.442695
  %v614 = vpow.pop %v613
  %v615 = vadd.f32 %v614, 1.0
  %v616 = vrcp.pop %v615
  %v617 = vmul.f32 1.0, %v616
  %v618 = vtanh.pop %v611
  %v619 = vmul.f32 %v617, %v527
  %621 = vrot.lane.b32.xlu0 %v618, 64
  %v622 = vpop.permute.xlu0 %621
  %v624 = vmul.f32 %v617, %v622
  %626 = vrot.lane.b32.xlu0 %v624, 32
  %v627 = vpop.permute.xlu0 %626
  %v629 = vadd.f32 %v619, %v627
  %v630 = vtanh.pop %v629
  %632 = vrot.lane.b32.xlu0 %v630, 64
  %v633 = vpop.permute.xlu0 %632
  %v635 = vmul.f32 %v617, %v633
  %s636 = scalar_lea.vmem %s0, 48
  %v637 = vld [vmem:[%s636] sm:$0xff]
  %639 = vrot.lane.b32.xlu0 %v635, 32
  %v640 = vpop.permute.xlu0 %639
  %v641 = vsel %vm27, %v640, 0
  %643 = vmatprep.subr.mxu0 0.0
  %644 = vmatpush1.msra.mxu0 0.0
  %645 = vmatprep.subr.mxu0 0.0
  %646 = vmatpush1.msra.mxu0 0.0
  %647 = vmatprep.subr.mxu0 0.0
  %648 = vmatpush1.msra.mxu0 0.0
  %649 = vmatprep.subr.mxu0 0.0
  %650 = vmatpush1.msra.mxu0 0.0
  %651 = vmatprep.subr.mxu0 0.0
  %652 = vmatpush1.msra.mxu0 0.0
  %653 = vmatprep.subr.mxu0 0.0
  %654 = vmatpush1.msra.mxu0 0.0
  %655 = vmatprep.subr.mxu0 0.0
  %656 = vmatpush1.msra.mxu0 0.0
  %657 = vmatprep.subr.mxu0 0.0
  %658 = vmatpush1.msra.mxu0 0.0
  %659 = vmatprep.subr.mxu0 0.0
  %660 = vmatpush1.msra.mxu0 0.0
  %661 = vmatprep.subr.mxu0 0.0
  %662 = vmatpush1.msra.mxu0 0.0
  %663 = vmatprep.subr.mxu0 0.0
  %664 = vmatpush1.msra.mxu0 0.0
  %665 = vmatprep.subr.mxu0 0.0
  %666 = vmatpush1.msra.mxu0 0.0
  %667 = vmatprep.subr.mxu0 0.0
  %668 = vmatpush1.msra.mxu0 %v20
  %669 = vmatprep.subr.mxu0 0.0
  %670 = vmatpush1.msra.mxu0 %v19
  %671 = vmatprep.subr.mxu0 0.0
  %672 = vmatpush1.msra.mxu0 %v18
  %673 = vmatprep.subr.mxu0 0.0
  %674 = vmatpush1.msra.mxu0 %v17
  %675 = vmatprep.subr.mxu0 0.0
  %676 = vmatpush2.msra.mxu0 0.0
  %677 = vmatprep.subr.mxu0 0.0
  %678 = vmatpush2.msra.mxu0 0.0
  %679 = vmatprep.subr.mxu0 0.0
  %680 = vmatpush2.msra.mxu0 0.0
  %681 = vmatprep.subr.mxu0 0.0
  %682 = vmatpush2.msra.mxu0 0.0
  %683 = vmatprep.subr.mxu0 0.0
  %684 = vmatpush2.msra.mxu0 0.0
  %685 = vmatprep.subr.mxu0 0.0
  %686 = vmatpush2.msra.mxu0 0.0
  %687 = vmatprep.subr.mxu0 0.0
  %688 = vmatpush2.msra.mxu0 0.0
  %689 = vmatprep.subr.mxu0 0.0
  %690 = vmatpush2.msra.mxu0 0.0
  %691 = vmatprep.subr.mxu0 0.0
  %692 = vmatpush2.msra.mxu0 0.0
  %693 = vmatprep.subr.mxu0 0.0
  %694 = vmatpush2.msra.mxu0 0.0
  %695 = vmatprep.subr.mxu0 0.0
  %696 = vmatpush2.msra.mxu0 0.0
  %697 = vmatprep.subr.mxu0 0.0
  %698 = vmatpush2.msra.mxu0 0.0
  %699 = vmatprep.subr.mxu0 0.0
  %700 = vmatpush2.msra.mxu0 0.0
  %701 = vmatprep.subr.mxu0 0.0
  %702 = vmatpush2.msra.mxu0 0.0
  %703 = vmatprep.subr.mxu0 0.0
  %704 = vmatpush2.msra.mxu0 0.0
  %705 = vmatprep.subr.mxu0 0.0
  %706 = vmatpush2.msra.mxu0 0.0
  %707 = vmatprep.mubr.f32.mxu0 0.0
  %708 = vmatmul.mubr.f32.gmra.mxu0 %v641
  %v709 = vpop.f32.mrf.mxu0
  %v710 = vadd.f32 0.0, %v709
  %v711 = vpop.f32.mrf.mxu0
  %712 = vdwg.mxu0
  %v713 = vadd.f32 %v637, %v710
  %v714 = vxor.u32 %v713, 2147483648
  %v715 = vmul.f32 %v714, 1.442695
  %v716 = vpow.pop %v715
  %v717 = vadd.f32 %v716, 1.0
  %v718 = vrcp.pop %v717
  %v719 = vmul.f32 1.0, %v718
  %v720 = vtanh.pop %v713
  %v721 = vmul.f32 %v719, %v629
  %723 = vrot.lane.b32.xlu0 %v720, 64
  %v724 = vpop.permute.xlu0 %723
  %v726 = vmul.f32 %v719, %v724
  %728 = vrot.lane.b32.xlu0 %v726, 32
  %v729 = vpop.permute.xlu0 %728
  %v731 = vadd.f32 %v721, %v729
  %v732 = vtanh.pop %v731
  %734 = vrot.lane.b32.xlu0 %v732, 64
  %v735 = vpop.permute.xlu0 %734
  %v737 = vmul.f32 %v719, %v735
  %s738 = scalar_lea.vmem %s0, 56
  %v739 = vld [vmem:[%s738] sm:$0xff]
  %741 = vrot.lane.b32.xlu0 %v737, 32
  %v742 = vpop.permute.xlu0 %741
  %v743 = vsel %vm27, %v742, 0
  %745 = vmatprep.subr.mxu0 0.0
  %746 = vmatpush1.msra.mxu0 0.0
  %747 = vmatprep.subr.mxu0 0.0
  %748 = vmatpush1.msra.mxu0 0.0
  %749 = vmatprep.subr.mxu0 0.0
  %750 = vmatpush1.msra.mxu0 0.0
  %751 = vmatprep.subr.mxu0 0.0
  %752 = vmatpush1.msra.mxu0 0.0
  %753 = vmatprep.subr.mxu0 0.0
  %754 = vmatpush1.msra.mxu0 0.0
  %755 = vmatprep.subr.mxu0 0.0
  %756 = vmatpush1.msra.mxu0 0.0
  %757 = vmatprep.subr.mxu0 0.0
  %758 = vmatpush1.msra.mxu0 0.0
  %759 = vmatprep.subr.mxu0 0.0
  %760 = vmatpush1.msra.mxu0 0.0
  %761 = vmatprep.subr.mxu0 0.0
  %762 = vmatpush1.msra.mxu0 0.0
  %763 = vmatprep.subr.mxu0 0.0
  %764 = vmatpush1.msra.mxu0 0.0
  %765 = vmatprep.subr.mxu0 0.0
  %766 = vmatpush1.msra.mxu0 0.0
  %767 = vmatprep.subr.mxu0 0.0
  %768 = vmatpush1.msra.mxu0 0.0
  %769 = vmatprep.subr.mxu0 0.0
  %770 = vmatpush1.msra.mxu0 %v20
  %771 = vmatprep.subr.mxu0 0.0
  %772 = vmatpush1.msra.mxu0 %v19
  %773 = vmatprep.subr.mxu0 0.0
  %774 = vmatpush1.msra.mxu0 %v18
  %775 = vmatprep.subr.mxu0 0.0
  %776 = vmatpush1.msra.mxu0 %v17
  %777 = vmatprep.subr.mxu0 0.0
  %778 = vmatpush2.msra.mxu0 0.0
  %779 = vmatprep.subr.mxu0 0.0
  %780 = vmatpush2.msra.mxu0 0.0
  %781 = vmatprep.subr.mxu0 0.0
  %782 = vmatpush2.msra.mxu0 0.0
  %783 = vmatprep.subr.mxu0 0.0
  %784 = vmatpush2.msra.mxu0 0.0
  %785 = vmatprep.subr.mxu0 0.0
  %786 = vmatpush2.msra.mxu0 0.0
  %787 = vmatprep.subr.mxu0 0.0
  %788 = vmatpush2.msra.mxu0 0.0
  %789 = vmatprep.subr.mxu0 0.0
  %790 = vmatpush2.msra.mxu0 0.0
  %791 = vmatprep.subr.mxu0 0.0
  %792 = vmatpush2.msra.mxu0 0.0
  %793 = vmatprep.subr.mxu0 0.0
  %794 = vmatpush2.msra.mxu0 0.0
  %795 = vmatprep.subr.mxu0 0.0
  %796 = vmatpush2.msra.mxu0 0.0
  %797 = vmatprep.subr.mxu0 0.0
  %798 = vmatpush2.msra.mxu0 0.0
  %799 = vmatprep.subr.mxu0 0.0
  %800 = vmatpush2.msra.mxu0 0.0
  %801 = vmatprep.subr.mxu0 0.0
  %802 = vmatpush2.msra.mxu0 0.0
  %803 = vmatprep.subr.mxu0 0.0
  %804 = vmatpush2.msra.mxu0 0.0
  %805 = vmatprep.subr.mxu0 0.0
  %806 = vmatpush2.msra.mxu0 0.0
  %807 = vmatprep.subr.mxu0 0.0
  %808 = vmatpush2.msra.mxu0 0.0
  %809 = vmatprep.mubr.f32.mxu0 0.0
  %810 = vmatmul.mubr.f32.gmra.mxu0 %v743
  %v811 = vpop.f32.mrf.mxu0
  %v812 = vadd.f32 0.0, %v811
  %v813 = vpop.f32.mrf.mxu0
  %814 = vdwg.mxu0
  %v815 = vadd.f32 %v739, %v812
  %v816 = vxor.u32 %v815, 2147483648
  %v817 = vmul.f32 %v816, 1.442695
  %v818 = vpow.pop %v817
  %v819 = vadd.f32 %v818, 1.0
  %v820 = vrcp.pop %v819
  %v821 = vmul.f32 1.0, %v820
  %v822 = vtanh.pop %v815
  %v823 = vmul.f32 %v821, %v731
  %825 = vrot.lane.b32.xlu0 %v822, 64
  %v826 = vpop.permute.xlu0 %825
  %v828 = vmul.f32 %v821, %v826
  %830 = vrot.lane.b32.xlu0 %v828, 32
  %v831 = vpop.permute.xlu0 %830
  %v833 = vadd.f32 %v823, %v831
  %v834 = vtanh.pop %v833
  %836 = vrot.lane.b32.xlu0 %v834, 64
  %v837 = vpop.permute.xlu0 %836
  %v839 = vmul.f32 %v821, %v837
  %v841 = vlaneseq
  %v842 = vshrl.u32 %v841, 7
  %v843 = vsub.s32 0, %v842
  %v844 = vrot.slane %v25, %v843
  %847 = vrot.lane.b32.xlu0 %v839, 32
  %v848 = vpop.permute.xlu0 %847
  %v849 = vsel %vm27, %v848, 0
  %851 = vmatprep.subr.mxu0 0.0
  %852 = vmatpush1.msra.mxu0 0.0
  %853 = vmatprep.subr.mxu0 0.0
  %854 = vmatpush1.msra.mxu0 0.0
  %855 = vmatprep.subr.mxu0 0.0
  %856 = vmatpush1.msra.mxu0 0.0
  %857 = vmatprep.subr.mxu0 0.0
  %858 = vmatpush1.msra.mxu0 0.0
  %859 = vmatprep.subr.mxu0 0.0
  %860 = vmatpush1.msra.mxu0 0.0
  %861 = vmatprep.subr.mxu0 0.0
  %862 = vmatpush1.msra.mxu0 0.0
  %863 = vmatprep.subr.mxu0 0.0
  %864 = vmatpush1.msra.mxu0 0.0
  %865 = vmatprep.subr.mxu0 0.0
  %866 = vmatpush1.msra.mxu0 0.0
  %867 = vmatprep.subr.mxu0 0.0
  %868 = vmatpush1.msra.mxu0 0.0
  %869 = vmatprep.subr.mxu0 0.0
  %870 = vmatpush1.msra.mxu0 0.0
  %871 = vmatprep.subr.mxu0 0.0
  %872 = vmatpush1.msra.mxu0 0.0
  %873 = vmatprep.subr.mxu0 0.0
  %874 = vmatpush1.msra.mxu0 0.0
  %875 = vmatprep.subr.mxu0 0.0
  %876 = vmatpush1.msra.mxu0 %v24
  %877 = vmatprep.subr.mxu0 0.0
  %878 = vmatpush1.msra.mxu0 %v23
  %879 = vmatprep.subr.mxu0 0.0
  %880 = vmatpush1.msra.mxu0 %v22
  %881 = vmatprep.subr.mxu0 0.0
  %882 = vmatpush1.msra.mxu0 %v21
  %883 = vmatprep.subr.mxu0 0.0
  %884 = vmatpush2.msra.mxu0 0.0
  %885 = vmatprep.subr.mxu0 0.0
  %886 = vmatpush2.msra.mxu0 0.0
  %887 = vmatprep.subr.mxu0 0.0
  %888 = vmatpush2.msra.mxu0 0.0
  %889 = vmatprep.subr.mxu0 0.0
  %890 = vmatpush2.msra.mxu0 0.0
  %891 = vmatprep.subr.mxu0 0.0
  %892 = vmatpush2.msra.mxu0 0.0
  %893 = vmatprep.subr.mxu0 0.0
  %894 = vmatpush2.msra.mxu0 0.0
  %895 = vmatprep.subr.mxu0 0.0
  %896 = vmatpush2.msra.mxu0 0.0
  %897 = vmatprep.subr.mxu0 0.0
  %898 = vmatpush2.msra.mxu0 0.0
  %899 = vmatprep.subr.mxu0 0.0
  %900 = vmatpush2.msra.mxu0 0.0
  %901 = vmatprep.subr.mxu0 0.0
  %902 = vmatpush2.msra.mxu0 0.0
  %903 = vmatprep.subr.mxu0 0.0
  %904 = vmatpush2.msra.mxu0 0.0
  %905 = vmatprep.subr.mxu0 0.0
  %906 = vmatpush2.msra.mxu0 0.0
  %907 = vmatprep.subr.mxu0 0.0
  %908 = vmatpush2.msra.mxu0 0.0
  %909 = vmatprep.subr.mxu0 0.0
  %910 = vmatpush2.msra.mxu0 0.0
  %911 = vmatprep.subr.mxu0 0.0
  %912 = vmatpush2.msra.mxu0 0.0
  %913 = vmatprep.subr.mxu0 0.0
  %914 = vmatpush2.msra.mxu0 0.0
  %915 = vmatprep.mubr.f32.mxu0 0.0
  %916 = vmatmul.mubr.f32.gmra.mxu0 %v849
  %v917 = vpop.f32.mrf.mxu0
  %v918 = vadd.f32 %v844, %v917
  %v919 = vpop.f32.mrf.mxu0
  %920 = vdwg.mxu0
  %921 = vst [vmem:[%s4] sm:$0xff] %v918
  // Predicated region
  $region18: #{text_rnn_forward.1} parent=0 // pred_check
    _
  $region19: #{text_rnn_forward.1} parent=0 // pred_check_branch
    %923 = sbr.rel (0) target = $region21
  $region20: #{text_rnn_forward.1} parent=0 // pred_region
    _
  $region21: #{text_rnn_forward.1} parent=0 // pred_fallthru
    _
  // Predicated region
  $region22: #{text_rnn_forward.1} parent=0 // pred_check
    _
  $region23: #{text_rnn_forward.1} parent=0 // pred_check_branch
    %925 = sbr.rel (0) target = $region25
  $region24: #{text_rnn_forward.1} parent=0 // pred_region
    _
  $region25: #{text_rnn_forward.1} parent=0 // pred_fallthru
    _

</llo_original>
